<compile_context>
chip_gen: v5e
topology: v5e:2x2
jax: 0.10.0
libtpu: 0.0.40
codegen_flags: <defaults>
</compile_context>

<pallas_src>
import functools

import jax
import jax.numpy as jnp
from jax.experimental import pallas as pl
from jax.experimental.pallas import tpu as pltpu

_LANE = 128
_NEG_PAD = -1e9        # pad value: exp(temperature*pad - max) underflows to 0
_FAST_GAP = 60.0       # strip max minus running column max; fast path safe below
_CLAMP_GAP = 80.0      # clamp so padded columns never produce inf on the fast path


def _contrastive_loss_kernel(p_ref, out_ref,
                             colmax_ref, colsum_ref, rowlse_ref, trace_ref,
                             *, temperature, batch, tm):
    i = pl.program_id(0)
    nsteps = pl.num_programs(0)

    @pl.when(i == 0)
    def _init():
        colmax_ref[...] = jnp.full(colmax_ref.shape, -jnp.inf, jnp.float32)
        colsum_ref[...] = jnp.zeros(colsum_ref.shape, jnp.float32)
        rowlse_ref[...] = jnp.zeros(rowlse_ref.shape, jnp.float32)
        trace_ref[...] = jnp.zeros(trace_ref.shape, jnp.float32)

    # Temperature-scaled (tm, Bp) strip in f32.
    p = p_ref[...].astype(jnp.float32) * temperature
    bp = p.shape[1]
    r8 = tm // 8

    # ---- forward direction: per-row log-sum-exp for rows of this strip ------
    m_r = jnp.max(p, axis=1, keepdims=True)                        # (tm, 1)
    e_r = jnp.exp(p - m_r)                                         # (tm, bp)  only full-strip exp on fast path
    lse_r = m_r + jnp.log(jnp.sum(e_r, axis=1, keepdims=True))     # (tm, 1)
    row_ids = i * tm + jax.lax.broadcasted_iota(jnp.int32, (tm, 1), 0)
    rowlse_ref[...] += jnp.sum(jnp.where(row_ids < batch, lse_r, 0.0),
                               keepdims=True)

    # ---- backward direction: online column stats in (8, bp) sublane slots ---
    p3 = p.reshape(r8, 8, bp)                                      # sublane-aligned view
    m_old8 = colmax_ref[...]                                       # (8, bp)
    m_new8 = jnp.maximum(m_old8, jnp.max(p3, axis=0))              # VPU leading-axis max
    rescale8 = jnp.exp(m_old8 - m_new8)                            # (8, bp)
    colmax_ref[...] = m_new8

    # Guard for the rank-1 exp reuse: safe iff the strip-wide max is within
    # _FAST_GAP of every VALID column's (per-slot) running max.
    c = jnp.max(m_r)                                               # scalar strip max
    col_ids8 = jax.lax.broadcasted_iota(jnp.int32, (8, bp), 1)
    gap8 = jnp.where(col_ids8 < batch, c - m_new8, -jnp.inf)
    fast_ok = jnp.max(gap8) <= _FAST_GAP

    @pl.when(fast_ok)
    def _fast():
        # exp(p - m_new) == e_r * exp(m_r - c) * exp(c - m_new): tm + 8*bp exps
        # instead of a second (tm, bp) exp.  Padded columns get clamped (their
        # row factors are exactly 0, so the product stays 0, never inf/NaN).
        col_fac = jnp.exp(jnp.minimum(c - m_new8, _CLAMP_GAP))     # (8, bp)
        scaled = (e_r * jnp.exp(m_r - c)).reshape(r8, 8, bp)       # VPU only
        colsum_ref[...] = (colsum_ref[...] * rescale8
                           + jnp.sum(scaled, axis=0) * col_fac)

    @pl.when(jnp.logical_not(fast_ok))
    def _exact():
        # Numerically exact two-pass fallback (rare: scaled spread > _FAST_GAP).
        contrib = jnp.sum(jnp.exp(p3 - m_new8[None]), axis=0)      # (8, bp)
        colsum_ref[...] = colsum_ref[...] * rescale8 + contrib

    # ---- trace: diagonal of strip i lives at columns [i*tm, i*tm + tm) ------
    if tm == bp:
        dblk = p                       # single-strip path: reuse the scaled f32 strip
    else:
        col0 = pl.multiple_of(i * tm, _LANE)
        dblk = p_ref[:, pl.ds(col0, tm)].astype(jnp.float32) * temperature
    rr = jax.lax.broadcasted_iota(jnp.int32, (tm, tm), 0)
    cc = jax.lax.broadcasted_iota(jnp.int32, (tm, tm), 1)
    diag_mask = (rr == cc) & ((i * tm + rr) < batch)
    trace_ref[...] += jnp.sum(jnp.where(diag_mask, dblk, 0.0), keepdims=True)

    # ---- finalize both scalar losses on the last strip ----------------------
    @pl.when(i == nsteps - 1)
    def _fin():
        m8 = colmax_ref[...]                                        # (8, bp)
        s8 = colsum_ref[...]
        m1 = jnp.max(m8, axis=0, keepdims=True)                     # single XLU reduce
        s1 = jnp.sum(s8 * jnp.exp(m8 - m1), axis=0, keepdims=True)  # (1, bp)
        lse_c = m1 + jnp.log(s1)                                    # (1, bp)
        col_ids = jax.lax.broadcasted_iota(jnp.int32, (1, bp), 1)
        collse = jnp.sum(jnp.where(col_ids < batch, lse_c, 0.0), keepdims=True)
        inv_b = jnp.float32(1.0 / batch)
        fwd = (rowlse_ref[...] - trace_ref[...]) * inv_b            # (1, 1)
        bwd = (collse - trace_ref[...]) * inv_b                     # (1, 1)
        sel = jax.lax.broadcasted_iota(jnp.int32, (1, 2), 1)
        out_ref[...] = jnp.where(sel == 0, fwd, bwd)                # (1, 2)


def _round_up(x, m):
    return ((x + m - 1) // m) * m


def _vmem_capacity_bytes():
    """Per-core VMEM capacity; falls back to the v7x (smallest) 64 MiB."""
    try:
        info = pltpu.get_tpu_info()
        cap = getattr(info, "vmem_capacity_bytes", None)
        if cap:
            return int(cap)
    except Exception:  # query unsupported on this backend / context
        pass
    return 64 * 1024 * 1024


def _footprint_bytes(tm, bp, itemsize):
    # double-buffered input block + ~6 live full-strip f32/i32 temporaries
    # (scaled p, e_r, column-contribution product, trace iotas/select) +
    # the (8, bp) column accumulators.
    return 2 * tm * bp * itemsize + 6 * tm * bp * 4 + 2 * 8 * bp * 4


def _pick_strip(bp, itemsize, max_strip=None):
    """Largest strip height (multiple of 128, dividing bp) fitting the VMEM budget."""
    cap = _vmem_capacity_bytes()
    budget = int(cap * 0.6)            # headroom for compiler scratch / spills
    nblk = bp // _LANE
    tm = _LANE                         # floor: never below one lane-tile of rows
    for k in range(nblk, 0, -1):
        if nblk % k:
            continue
        cand = k * _LANE
        if max_strip is not None and cand > max_strip:
            continue
        if _footprint_bytes(cand, bp, itemsize) <= budget:
            tm = cand
            break
    fp = _footprint_bytes(tm, bp, itemsize)
    vmem_limit = int(min(cap, max(32 * 1024 * 1024, fp + fp // 4 + (4 << 20))))
    return tm, vmem_limit


def contrastive_loss(predictions: jax.Array,
                     temperature: float = 10.0,
                     eps: float = 1e-8,
                     max_strip: int = None):
    """Bidirectional contrastive (InfoNCE) loss matching the PyTorch module.

    Args:
        predictions: (B, B) similarity matrix.  f32 or bf16 (cast at the
            producer to halve HBM traffic on v5e/v6e; reductions stay f32).
        temperature: scaling factor applied before both softmaxes.
        eps: kept for API parity with the PyTorch module (unused in forward).
        max_strip: optional cap on the row-strip height (testing / tuning).
    Returns:
        (forward_loss, backward_loss) float32 scalars.
    """
    del eps  # unused by the reference forward pass
    b = predictions.shape[0]
    assert predictions.ndim == 2 and predictions.shape == (b, b), \
        "predictions must be square (B, B)"

    bp = _round_up(max(b, _LANE), _LANE)
    itemsize = jnp.dtype(predictions.dtype).itemsize
    tm, vmem_limit = _pick_strip(bp, itemsize, max_strip)

    if bp != b:
        # Pad to a square, tile-aligned matrix with a very negative value so
        # padded entries underflow to 0 in every softmax; padded rows/cols and
        # diagonal entries are additionally masked inside the kernel.
        predictions = jnp.pad(predictions, ((0, bp - b), (0, bp - b)),
                              constant_values=_NEG_PAD)

    kernel = functools.partial(_contrastive_loss_kernel,
                               temperature=float(temperature),
                               batch=b, tm=tm)

    out = pl.pallas_call(
        kernel,
        out_shape=jax.ShapeDtypeStruct((1, 2), jnp.float32),
        grid_spec=pltpu.PrefetchScalarGridSpec(
            num_scalar_prefetch=0,
            grid=(bp // tm,),
            in_specs=[pl.BlockSpec((tm, bp), lambda i: (i, 0))],
            out_specs=pl.BlockSpec((1, 2), lambda i: (0, 0)),
            scratch_shapes=[
                pltpu.VMEM((8, bp), jnp.float32),   # running column max (8 sublane slots)
                pltpu.VMEM((8, bp), jnp.float32),   # running column sum-exp
                pltpu.VMEM((1, 1), jnp.float32),    # sum of row log-sum-exps
                pltpu.VMEM((1, 1), jnp.float32),    # trace of scaled matrix
            ],
        ),
        compiler_params=pltpu.CompilerParams(
            dimension_semantics=("arbitrary",),
            vmem_limit_bytes=vmem_limit,
        ),
    )(predictions)

    return out[0, 0], out[0, 1]


def _reference(predictions, temperature=10.0):
    """Pure-JAX reference mirroring F.cross_entropy with arange labels."""
    p = predictions.astype(jnp.float32) * temperature
    lse_f = jax.scipy.special.logsumexp(p, axis=1)
    lse_b = jax.scipy.special.logsumexp(p, axis=0)
    diag = jnp.diagonal(p)
    return jnp.mean(lse_f - diag), jnp.mean(lse_b - diag)


if __name__ == "__main__":
    key = jax.random.PRNGKey(0)

    # 1) GLoRIA-sized batch: single-block fast path (grid=(1,), tm == Bp).
    b1 = 8
    preds1 = jax.random.normal(key, (b1, b1), dtype=jnp.float32)
    fwd1, bwd1 = contrastive_loss(preds1, temperature=10.0)
    jax.block_until_ready((fwd1, bwd1))
    r1f, r1b = _reference(preds1, temperature=10.0)
    assert jnp.allclose(fwd1, r1f, rtol=1e-4, atol=1e-4), (fwd1, r1f)
    assert jnp.allclose(bwd1, r1b, rtol=1e-4, atol=1e-4), (bwd1, r1b)

    # 2) Non-tile-aligned, multi-strip case (max_strip forces 3 row strips):
    #    exercises padding, online column stats and the single-exp fast path.
    b2 = 300
    preds2 = jax.random.normal(jax.random.PRNGKey(1), (b2, b2), dtype=jnp.float32)
    fwd2, bwd2 = contrastive_loss(preds2, temperature=10.0, max_strip=128)
    jax.block_until_ready((fwd2, bwd2))
    r2f, r2b = _reference(preds2, temperature=10.0)
    assert jnp.allclose(fwd2, r2f, rtol=1e-4, atol=1e-4), (fwd2, r2f)
    assert jnp.allclose(bwd2, r2b, rtol=1e-4, atol=1e-4), (bwd2, r2b)

    # 3) Pathological column spread (>> 60 scaled units): exercises the exact
    #    two-pass fallback branch of the online column statistics.
    preds3 = preds2.at[:, 5].set(-30.0)
    fwd3, bwd3 = contrastive_loss(preds3, temperature=10.0, max_strip=128)
    jax.block_until_ready((fwd3, bwd3))
    r3f, r3b = _reference(preds3, temperature=10.0)
    assert jnp.allclose(fwd3, r3f, rtol=1e-4, atol=1e-3), (fwd3, r3f)
    assert jnp.allclose(bwd3, r3b, rtol=1e-4, atol=1e-3), (bwd3, r3b)

    # 4) bf16 inputs (bandwidth win on v5e/v6e); reductions stay f32.
    preds4 = preds2.astype(jnp.bfloat16)
    fwd4, bwd4 = contrastive_loss(preds4, temperature=10.0)
    jax.block_until_ready((fwd4, bwd4))
    r4f, r4b = _reference(preds4, temperature=10.0)
    assert jnp.allclose(fwd4, r4f, rtol=1e-3, atol=1e-3), (fwd4, r4f)
    assert jnp.allclose(bwd4, r4b, rtol=1e-3, atol=1e-3), (bwd4, r4b)

    print("KERNEL_OK")
</pallas_src>

<mosaic_0001>
module attributes {stable_mosaic.version = 11 : i64} {
  func.func @_contrastive_loss_kernel(%arg0: i32, %arg1: memref<128x128xf32, #tpu.memory_space<vmem>>, %arg2: memref<1x2xf32, #tpu.memory_space<vmem>>, %arg3: memref<8x128xf32, #tpu.memory_space<vmem>>, %arg4: memref<8x128xf32, #tpu.memory_space<vmem>>, %arg5: memref<1x1xf32, #tpu.memory_space<vmem>>, %arg6: memref<1x1xf32, #tpu.memory_space<vmem>>) attributes {dimension_semantics = [#tpu.dimension_semantics<arbitrary>], iteration_bounds = array<i64: 1>, scalar_prefetch = 0 : i64, scratch_operands = 4 : i64, tpu.core_type = #tpu.core_type<tc>, window_params = [{transform_indices = @transform_0, window_bounds = array<i64: 128, 128>}, {pipeline_mode = #tpu.pipeline_mode<synchronous>, transform_indices = @transform_1, window_bounds = array<i64: 1, 2>}]} {
    %c0_i32 = arith.constant 0 : i32
    %0 = arith.cmpi eq, %arg0, %c0_i32 : i32
    %1 = arith.extui %0 : i1 to i32
    %c0_i32_0 = arith.constant 0 : i32
    %2 = arith.cmpi ne, %1, %c0_i32_0 : i32
    scf.if %2 {
      %cst_32 = arith.constant 0xFF800000 : f32
      %81 = vector.broadcast %cst_32 : f32 to vector<8x128xf32>
      %c0_33 = arith.constant 0 : index
      %c0_34 = arith.constant 0 : index
      %82 = vector.load %arg3[%c0_33, %c0_34] : memref<8x128xf32, #tpu.memory_space<vmem>>, vector<8x128xf32>
      tpu.vector_store %arg3[%c0_33, %c0_34], %81 {strides = array<i32>} : memref<8x128xf32, #tpu.memory_space<vmem>>, vector<8x128xf32>,
      %cst_35 = arith.constant 0.000000e+00 : f32
      %83 = vector.broadcast %cst_35 : f32 to vector<8x128xf32>
      %c0_36 = arith.constant 0 : index
      %c0_37 = arith.constant 0 : index
      %84 = vector.load %arg4[%c0_36, %c0_37] : memref<8x128xf32, #tpu.memory_space<vmem>>, vector<8x128xf32>
      tpu.vector_store %arg4[%c0_36, %c0_37], %83 {strides = array<i32>} : memref<8x128xf32, #tpu.memory_space<vmem>>, vector<8x128xf32>,
      %cst_38 = arith.constant 0.000000e+00 : f32
      %85 = vector.broadcast %cst_38 : f32 to vector<1x1xf32>
      %c0_39 = arith.constant 0 : index
      %c0_40 = arith.constant 0 : index
      %86 = vector.load %arg5[%c0_39, %c0_40] : memref<1x1xf32, #tpu.memory_space<vmem>>, vector<1x1xf32>
      tpu.vector_store %arg5[%c0_39, %c0_40], %85 {strides = array<i32>} : memref<1x1xf32, #tpu.memory_space<vmem>>, vector<1x1xf32>,
      %cst_41 = arith.constant 0.000000e+00 : f32
      %87 = vector.broadcast %cst_41 : f32 to vector<1x1xf32>
      %c0_42 = arith.constant 0 : index
      %c0_43 = arith.constant 0 : index
      %88 = vector.load %arg6[%c0_42, %c0_43] : memref<1x1xf32, #tpu.memory_space<vmem>>, vector<1x1xf32>
      tpu.vector_store %arg6[%c0_42, %c0_43], %87 {strides = array<i32>} : memref<1x1xf32, #tpu.memory_space<vmem>>, vector<1x1xf32>,
    } else {
    }
    %c0 = arith.constant 0 : index
    %c0_1 = arith.constant 0 : index
    %3 = vector.load %arg1[%c0, %c0_1] : memref<128x128xf32, #tpu.memory_space<vmem>>, vector<128x128xf32>
    %cst = arith.constant 1.000000e+01 : f32
    %4 = vector.broadcast %cst : f32 to vector<128x128xf32>
    %5 = arith.mulf %3, %4 : vector<128x128xf32>
    %cst_2 = arith.constant dense<0xFF800000> : vector<128xf32>
    %6 = vector.multi_reduction <maximumf>, %5, %cst_2 [1] : vector<128x128xf32> to vector<128xf32>
    %7 = vector.shape_cast %6 : vector<128xf32> to vector<128x1xf32>
    %8 = vector.broadcast %7 : vector<128x1xf32> to vector<128x128xf32>
    %9 = arith.subf %5, %8 : vector<128x128xf32>
    %10 = math.exp %9 : vector<128x128xf32>
    %cst_3 = arith.constant dense<0.000000e+00> : vector<128xf32>
    %11 = vector.multi_reduction <add>, %10, %cst_3 [1] : vector<128x128xf32> to vector<128xf32>
    %12 = vector.shape_cast %11 : vector<128xf32> to vector<128x1xf32>
    %13 = math.log %12 : vector<128x1xf32>
    %14 = arith.addf %7, %13 : vector<128x1xf32>
    %c128_i32 = arith.constant 128 : i32
    %15 = arith.muli %arg0, %c128_i32 : i32
    %16 = tpu.iota {dimensions = array<i32: 0>} : vector<128x1xi32>
    %17 = vector.broadcast %15 : i32 to vector<128x1xi32>
    %18 = arith.addi %17, %16 : vector<128x1xi32>
    %c0_4 = arith.constant 0 : index
    %c0_5 = arith.constant 0 : index
    %19 = vector.load %arg5[%c0_4, %c0_5] : memref<1x1xf32, #tpu.memory_space<vmem>>, vector<1x1xf32>
    %c8_i32 = arith.constant 8 : i32
    %20 = vector.broadcast %c8_i32 : i32 to vector<128x1xi32>
    %21 = arith.cmpi slt, %18, %20 : vector<128x1xi32>
    %cst_6 = arith.constant 0.000000e+00 : f32
    %22 = vector.broadcast %cst_6 : f32 to vector<128x1xf32>
    %23 = arith.select %21, %14, %22 : vector<128x1xi1>, vector<128x1xf32>
    %24 = vector.shape_cast %23 : vector<128x1xf32> to vector<1x128x1xf32>
    %cst_7 = arith.constant dense<0.000000e+00> : vector<1xf32>
    %25 = vector.multi_reduction <add>, %24, %cst_7 [1, 2] : vector<1x128x1xf32> to vector<1xf32>
    %26 = vector.shape_cast %25 : vector<1xf32> to vector<1x1x1xf32>
    %27 = vector.extract %26[0, 0, 0] : f32 from vector<1x1x1xf32>
    %28 = vector.broadcast %27 : f32 to vector<1x1xf32>
    %29 = arith.addf %19, %28 : vector<1x1xf32>
    %c0_8 = arith.constant 0 : index
    %c0_9 = arith.constant 0 : index
    %30 = vector.load %arg5[%c0_8, %c0_9] : memref<1x1xf32, #tpu.memory_space<vmem>>, vector<1x1xf32>
    tpu.vector_store %arg5[%c0_8, %c0_9], %29 {strides = array<i32>} : memref<1x1xf32, #tpu.memory_space<vmem>>, vector<1x1xf32>,
    %31 = vector.shape_cast %5 : vector<128x128xf32> to vector<16x8x128xf32>
    %c0_10 = arith.constant 0 : index
    %c0_11 = arith.constant 0 : index
    %32 = vector.load %arg3[%c0_10, %c0_11] : memref<8x128xf32, #tpu.memory_space<vmem>>, vector<8x128xf32>
    %cst_12 = arith.constant dense<0xFF800000> : vector<8x128xf32>
    %33 = vector.multi_reduction <maximumf>, %31, %cst_12 [0] : vector<16x8x128xf32> to vector<8x128xf32>
    %34 = arith.maximumf %32, %33 : vector<8x128xf32>
    %35 = arith.subf %32, %34 : vector<8x128xf32>
    %36 = math.exp %35 : vector<8x128xf32>
    %c0_13 = arith.constant 0 : index
    %c0_14 = arith.constant 0 : index
    %37 = vector.load %arg3[%c0_13, %c0_14] : memref<8x128xf32, #tpu.memory_space<vmem>>, vector<8x128xf32>
    tpu.vector_store %arg3[%c0_13, %c0_14], %34 {strides = array<i32>} : memref<8x128xf32, #tpu.memory_space<vmem>>, vector<8x128xf32>,
    %38 = vector.shape_cast %7 : vector<128x1xf32> to vector<1x128x1xf32>
    %cst_15 = arith.constant dense<0xFF800000> : vector<1xf32>
    %39 = vector.multi_reduction <maximumf>, %38, %cst_15 [1, 2] : vector<1x128x1xf32> to vector<1xf32>
    %40 = vector.shape_cast %39 : vector<1xf32> to vector<1x1x1xf32>
    %41 = vector.extract %40[0, 0, 0] : f32 from vector<1x1x1xf32>
    %42 = tpu.iota {dimensions = array<i32: 1>} : vector<8x128xi32>
    %c8_i32_16 = arith.constant 8 : i32
    %43 = vector.broadcast %c8_i32_16 : i32 to vector<8x128xi32>
    %44 = arith.cmpi slt, %42, %43 : vector<8x128xi32>
    %45 = vector.broadcast %41 : f32 to vector<8x128xf32>
    %46 = arith.subf %45, %34 : vector<8x128xf32>
    %cst_17 = arith.constant 0xFF800000 : f32
    %47 = vector.broadcast %cst_17 : f32 to vector<8x128xf32>
    %48 = arith.select %44, %46, %47 : vector<8x128xi1>, vector<8x128xf32>
    %49 = vector.shape_cast %48 : vector<8x128xf32> to vector<1x8x128xf32>
    %cst_18 = arith.constant dense<0xFF800000> : vector<1xf32>
    %50 = vector.multi_reduction <maximumf>, %49, %cst_18 [1, 2] : vector<1x8x128xf32> to vector<1xf32>
    %51 = vector.shape_cast %50 : vector<1xf32> to vector<1x1x1xf32>
    %52 = vector.extract %51[0, 0, 0] : f32 from vector<1x1x1xf32>
    %cst_19 = arith.constant 6.000000e+01 : f32
    %53 = arith.cmpf ole, %52, %cst_19 : f32
    %54 = arith.extui %53 : i1 to i32
    %c0_i32_20 = arith.constant 0 : i32
    %55 = arith.cmpi ne, %54, %c0_i32_20 : i32
    scf.if %55 {
      %81 = vector.broadcast %41 : f32 to vector<8x128xf32>
      %82 = arith.subf %81, %34 : vector<8x128xf32>
      %cst_32 = arith.constant 8.000000e+01 : f32
      %83 = vector.broadcast %cst_32 : f32 to vector<8x128xf32>
      %84 = arith.minimumf %82, %83 : vector<8x128xf32>
      %85 = math.exp %84 : vector<8x128xf32>
      %86 = vector.broadcast %41 : f32 to vector<128x1xf32>
      %87 = arith.subf %7, %86 : vector<128x1xf32>
      %88 = math.exp %87 : vector<128x1xf32>
      %89 = vector.broadcast %88 : vector<128x1xf32> to vector<128x128xf32>
      %90 = arith.mulf %10, %89 : vector<128x128xf32>
      %91 = vector.shape_cast %90 : vector<128x128xf32> to vector<16x8x128xf32>
      %c0_33 = arith.constant 0 : index
      %c0_34 = arith.constant 0 : index
      %92 = vector.load %arg4[%c0_33, %c0_34] : memref<8x128xf32, #tpu.memory_space<vmem>>, vector<8x128xf32>
      %93 = arith.mulf %92, %36 : vector<8x128xf32>
      %cst_35 = arith.constant dense<0.000000e+00> : vector<8x128xf32>
      %94 = vector.multi_reduction <add>, %91, %cst_35 [0] : vector<16x8x128xf32> to vector<8x128xf32>
      %95 = arith.mulf %94, %85 : vector<8x128xf32>
      %96 = arith.addf %93, %95 : vector<8x128xf32>
      %c0_36 = arith.constant 0 : index
      %c0_37 = arith.constant 0 : index
      %97 = vector.load %arg4[%c0_36, %c0_37] : memref<8x128xf32, #tpu.memory_space<vmem>>, vector<8x128xf32>
      tpu.vector_store %arg4[%c0_36, %c0_37], %96 {strides = array<i32>} : memref<8x128xf32, #tpu.memory_space<vmem>>, vector<8x128xf32>,
    } else {
    }
    %true = arith.constant true
    %56 = arith.xori %53, %true : i1
    %57 = arith.extui %56 : i1 to i32
    %c0_i32_21 = arith.constant 0 : i32
    %58 = arith.cmpi ne, %57, %c0_i32_21 : i32
    scf.if %58 {
      %81 = vector.shape_cast %34 : vector<8x128xf32> to vector<1x8x128xf32>
      %82 = vector.broadcast %81 : vector<1x8x128xf32> to vector<16x8x128xf32>
      %83 = arith.subf %31, %82 : vector<16x8x128xf32>
      %84 = math.exp %83 : vector<16x8x128xf32>
      %cst_32 = arith.constant dense<0.000000e+00> : vector<8x128xf32>
      %85 = vector.multi_reduction <add>, %84, %cst_32 [0] : vector<16x8x128xf32> to vector<8x128xf32>
      %c0_33 = arith.constant 0 : index
      %c0_34 = arith.constant 0 : index
      %86 = vector.load %arg4[%c0_33, %c0_34] : memref<8x128xf32, #tpu.memory_space<vmem>>, vector<8x128xf32>
      %87 = arith.mulf %86, %36 : vector<8x128xf32>
      %88 = arith.addf %87, %85 : vector<8x128xf32>
      %c0_35 = arith.constant 0 : index
      %c0_36 = arith.constant 0 : index
      %89 = vector.load %arg4[%c0_35, %c0_36] : memref<8x128xf32, #tpu.memory_space<vmem>>, vector<8x128xf32>
      tpu.vector_store %arg4[%c0_35, %c0_36], %88 {strides = array<i32>} : memref<8x128xf32, #tpu.memory_space<vmem>>, vector<8x128xf32>,
    } else {
    }
    %59 = tpu.iota {dimensions = array<i32: 0>} : vector<128x128xi32>
    %60 = tpu.iota {dimensions = array<i32: 1>} : vector<128x128xi32>
    %61 = arith.cmpi eq, %59, %60 : vector<128x128xi32>
    %c128_i32_22 = arith.constant 128 : i32
    %62 = arith.muli %arg0, %c128_i32_22 : i32
    %63 = vector.broadcast %62 : i32 to vector<128x128xi32>
    %64 = arith.addi %63, %59 : vector<128x128xi32>
    %c8_i32_23 = arith.constant 8 : i32
    %65 = vector.broadcast %c8_i32_23 : i32 to vector<128x128xi32>
    %66 = arith.cmpi slt, %64, %65 : vector<128x128xi32>
    %67 = arith.andi %61, %66 : vector<128x128xi1>
    %c0_24 = arith.constant 0 : index
    %c0_25 = arith.constant 0 : index
    %68 = vector.load %arg6[%c0_24, %c0_25] : memref<1x1xf32, #tpu.memory_space<vmem>>, vector<1x1xf32>
    %cst_26 = arith.constant 0.000000e+00 : f32
    %69 = vector.broadcast %cst_26 : f32 to vector<128x128xf32>
    %70 = arith.select %67, %5, %69 : vector<128x128xi1>, vector<128x128xf32>
    %71 = vector.shape_cast %70 : vector<128x128xf32> to vector<1x128x128xf32>
    %cst_27 = arith.constant dense<0.000000e+00> : vector<1xf32>
    %72 = vector.multi_reduction <add>, %71, %cst_27 [1, 2] : vector<1x128x128xf32> to vector<1xf32>
    %73 = vector.shape_cast %72 : vector<1xf32> to vector<1x1x1xf32>
    %74 = vector.extract %73[0, 0, 0] : f32 from vector<1x1x1xf32>
    %75 = vector.broadcast %74 : f32 to vector<1x1xf32>
    %76 = arith.addf %68, %75 : vector<1x1xf32>
    %c0_28 = arith.constant 0 : index
    %c0_29 = arith.constant 0 : index
    %77 = vector.load %arg6[%c0_28, %c0_29] : memref<1x1xf32, #tpu.memory_space<vmem>>, vector<1x1xf32>
    tpu.vector_store %arg6[%c0_28, %c0_29], %76 {strides = array<i32>} : memref<1x1xf32, #tpu.memory_space<vmem>>, vector<1x1xf32>,
    %c0_i32_30 = arith.constant 0 : i32
    %78 = arith.cmpi eq, %arg0, %c0_i32_30 : i32
    %79 = arith.extui %78 : i1 to i32
    %c0_i32_31 = arith.constant 0 : i32
    %80 = arith.cmpi ne, %79, %c0_i32_31 : i32
    scf.if %80 {
      %c0_32 = arith.constant 0 : index
      %c0_33 = arith.constant 0 : index
      %81 = vector.load %arg3[%c0_32, %c0_33] : memref<8x128xf32, #tpu.memory_space<vmem>>, vector<8x128xf32>
      %c0_34 = arith.constant 0 : index
      %c0_35 = arith.constant 0 : index
      %82 = vector.load %arg4[%c0_34, %c0_35] : memref<8x128xf32, #tpu.memory_space<vmem>>, vector<8x128xf32>
      %cst_36 = arith.constant dense<0xFF800000> : vector<128xf32>
      %83 = vector.multi_reduction <maximumf>, %81, %cst_36 [0] : vector<8x128xf32> to vector<128xf32>
      %84 = vector.shape_cast %83 : vector<128xf32> to vector<1x128xf32>
      %85 = vector.broadcast %84 : vector<1x128xf32> to vector<8x128xf32>
      %86 = arith.subf %81, %85 : vector<8x128xf32>
      %87 = math.exp %86 : vector<8x128xf32>
      %88 = arith.mulf %82, %87 : vector<8x128xf32>
      %cst_37 = arith.constant dense<0.000000e+00> : vector<128xf32>
      %89 = vector.multi_reduction <add>, %88, %cst_37 [0] : vector<8x128xf32> to vector<128xf32>
      %90 = vector.shape_cast %89 : vector<128xf32> to vector<1x128xf32>
      %91 = math.log %90 : vector<1x128xf32>
      %92 = arith.addf %84, %91 : vector<1x128xf32>
      %93 = tpu.iota {dimensions = array<i32: 1>} : vector<1x128xi32>
      %c8_i32_38 = arith.constant 8 : i32
      %94 = vector.broadcast %c8_i32_38 : i32 to vector<1x128xi32>
      %95 = arith.cmpi slt, %93, %94 : vector<1x128xi32>
      %cst_39 = arith.constant 0.000000e+00 : f32
      %96 = vector.broadcast %cst_39 : f32 to vector<1x128xf32>
      %97 = arith.select %95, %92, %96 : vector<1x128xi1>, vector<1x128xf32>
      %98 = vector.shape_cast %97 : vector<1x128xf32> to vector<1x1x128xf32>
      %cst_40 = arith.constant dense<0.000000e+00> : vector<1xf32>
      %99 = vector.multi_reduction <add>, %98, %cst_40 [1, 2] : vector<1x1x128xf32> to vector<1xf32>
      %100 = vector.shape_cast %99 : vector<1xf32> to vector<1x1x1xf32>
      %101 = vector.extract %100[0, 0, 0] : f32 from vector<1x1x1xf32>
      %102 = vector.broadcast %101 : f32 to vector<1x1xf32>
      %c0_41 = arith.constant 0 : index
      %c0_42 = arith.constant 0 : index
      %103 = vector.load %arg5[%c0_41, %c0_42] : memref<1x1xf32, #tpu.memory_space<vmem>>, vector<1x1xf32>
      %c0_43 = arith.constant 0 : index
      %c0_44 = arith.constant 0 : index
      %104 = vector.load %arg6[%c0_43, %c0_44] : memref<1x1xf32, #tpu.memory_space<vmem>>, vector<1x1xf32>
      %105 = arith.subf %103, %104 : vector<1x1xf32>
      %cst_45 = arith.constant 1.250000e-01 : f32
      %106 = vector.broadcast %cst_45 : f32 to vector<1x1xf32>
      %107 = arith.mulf %105, %106 : vector<1x1xf32>
      %c0_46 = arith.constant 0 : index
      %c0_47 = arith.constant 0 : index
      %108 = vector.load %arg6[%c0_46, %c0_47] : memref<1x1xf32, #tpu.memory_space<vmem>>, vector<1x1xf32>
      %109 = arith.subf %102, %108 : vector<1x1xf32>
      %cst_48 = arith.constant 1.250000e-01 : f32
      %110 = vector.broadcast %cst_48 : f32 to vector<1x1xf32>
      %111 = arith.mulf %109, %110 : vector<1x1xf32>
      %112 = tpu.iota {dimensions = array<i32: 1>} : vector<1x2xi32>
      %c0_i32_49 = arith.constant 0 : i32
      %113 = vector.broadcast %c0_i32_49 : i32 to vector<1x2xi32>
      %114 = arith.cmpi eq, %112, %113 : vector<1x2xi32>
      %115 = vector.shape_cast %107 : vector<1x1xf32> to vector<1x1xf32>
      %116 = vector.broadcast %115 : vector<1x1xf32> to vector<1x2xf32>
      %117 = vector.shape_cast %111 : vector<1x1xf32> to vector<1x1xf32>
      %118 = vector.broadcast %117 : vector<1x1xf32> to vector<1x2xf32>
      %119 = arith.select %114, %116, %118 : vector<1x2xi1>, vector<1x2xf32>
      %c0_50 = arith.constant 0 : index
      %c0_51 = arith.constant 0 : index
      %120 = vector.load %arg2[%c0_50, %c0_51] : memref<1x2xf32, #tpu.memory_space<vmem>>, vector<1x2xf32>
      tpu.vector_store %arg2[%c0_50, %c0_51], %119 {strides = array<i32>} : memref<1x2xf32, #tpu.memory_space<vmem>>, vector<1x2xf32>,
    } else {
    }
    return
  }
  func.func @transform_0(%arg0: i32) -> (i32, i32) {
    %c0_i32 = arith.constant 0 : i32
    %c0_i32_0 = arith.constant 0 : i32
    return %arg0, %c0_i32 : i32, i32
  }
  func.func @transform_1(%arg0: i32) -> (i32, i32) {
    %c0_i32 = arith.constant 0 : i32
    %c0_i32_0 = arith.constant 0 : i32
    %c0_i32_1 = arith.constant 0 : i32
    return %c0_i32, %c0_i32_0 : i32, i32
  }
}

</mosaic_0001>

<llo_original>
// kernel: tpu_custom_call.1
$region0: #{tpu_custom_call.1}
  #allocation0 [shape = 'u32[]', space=smem, size = 0x4, offset = 0x4, fixed_abs, tag = 'smem constant byte address 0x4 - core index']
  #allocation1 [shape = 'u32[72,128]{1,0:T(1,128)}', space=vmem, size = 0x9000, scoped, tag = 'internal scratch']
  #allocation2 [shape = 'f32[8,128]{1,0:T(8,128)}', space=vmem, size = 0x1000, scoped, tag = 'scratch operand']
  #allocation3 [shape = 'f32[8,128]{1,0:T(8,128)}', space=vmem, size = 0x1000, scoped, tag = 'scratch operand']
  #allocation4 [shape = 'f32[1,1]{1,0:T(1,128)}', space=vmem, size = 0x200, scoped, tag = 'scratch operand']
  #allocation5 [shape = 'f32[1,1]{1,0:T(1,128)}', space=vmem, size = 0x200, scoped, tag = 'scratch operand']
  %s0 = inlined_call_operand.hbm [shape: f32[128,128], index: 0, kind: input, shape index: {}]
  %s1 = inlined_call_operand.hbm [shape: f32[1,2], index: 1, kind: output, shape index: {}]
  %s2 = sld [smem:[#allocation0]]
  $region34: #{tpu_custom_call.1} parent=0
    _
  %s4 = ssub.s32 1, %s2
  %s5 = scalar_select 0, %s4, %s2
  $region1: #{tpu_custom_call.1} parent=0
    #allocation6 [shape = 'u8[65536]{0}', space=vmem, size = 0x10000, scoped, tag = 'input window, operand 0, single buffered']
    #allocation7 [shape = 's32[1]{0}', space=sflag, size = 0x4, scoped, tag = 'scoped memory for tpu_custom_call.1']
    #allocation8 [shape = 's32[1]{0}', space=sflag, size = 0x4, scoped, tag = 'scoped memory for tpu_custom_call.1']
    #allocation9 [shape = 'u8[512]{0}', space=vmem, size = 0x400, scoped, tag = 'output window, operand 0, single buffered']
    %6 = vsyncpa [#allocation7], 0
    %7 = vsyncpa [#allocation8], 0
    // Predicated region
    $region2: #{tpu_custom_call.1} parent=1 // pred_check
      _
    $region3: #{tpu_custom_call.1} parent=1 // pred_check_branch
      %9 = sbr.rel (0) target = $region5
    $region4: #{tpu_custom_call.1} parent=1 // pred_region
      %11 = vsyncadd [#allocation7], 0
      %s12 = sshll.u32 %s0, 4
      %s13 = int_to_ptr.hbm [resolvable:$true] %s12
      %s14 = sshll.u32 [#allocation6], 4
      %s15 = int_to_ptr.vmem [resolvable:$true] %s14
      %20 = dma.hbm_to_vmem [thread:$0]  %s13, 2048, %s15, [#allocation7], 128, 128, 8
    $region5: #{tpu_custom_call.1} parent=1 // pred_fallthru
      _
    // Predicated region
    $region6: #{tpu_custom_call.1} parent=1 // pred_check
      _
    $region7: #{tpu_custom_call.1} parent=1 // pred_check_branch
      %22 = sbr.rel (0) target = $region9
    $region8: #{tpu_custom_call.1} parent=1 // pred_region
      %24 = dma.done [#allocation7], 2048
    $region9: #{tpu_custom_call.1} parent=1 // pred_fallthru
      _
    %p25 = scmp.eq.s32.totalorder 0, 0
    // Predicated region
    $region10: #{tpu_custom_call.1} parent=1 // pred_check
      %p26 = pneg %p25
    $region11: #{tpu_custom_call.1} parent=1 // pred_check_branch
      %28 = sbr.rel (%p26) target = $region13
    $region12: #{tpu_custom_call.1} parent=1 // pred_region
      %29 = vst [vmem:[#allocation2] sm:$0xff] -inf
      %30 = vst [vmem:[#allocation3] sm:$0xff] 0.0
      %vm31 = vcmask 0
      %32 = vst.msk [vmem:[#allocation4] sm:$0x1] %vm31, 0.0
      %33 = vst.msk [vmem:[#allocation5] sm:$0x1] %vm31, 0.0
    $region13: #{tpu_custom_call.1} parent=1 // pred_fallthru
      _
    %v34 = vld [vmem:[#allocation6] sm:$0xff]
    %v35 = vld [vmem:[#allocation6 + $0x8] sm:$0xff]
    %v36 = vld [vmem:[#allocation6 + $0x10] sm:$0xff]
    %v37 = vld [vmem:[#allocation6 + $0x18] sm:$0xff]
    %v38 = vld [vmem:[#allocation6 + $0x20] sm:$0xff]
    %v39 = vld [vmem:[#allocation6 + $0x28] sm:$0xff]
    %v40 = vld [vmem:[#allocation6 + $0x30] sm:$0xff]
    %v41 = vld [vmem:[#allocation6 + $0x38] sm:$0xff]
    %v42 = vld [vmem:[#allocation6 + $0x40] sm:$0xff]
    %v43 = vld [vmem:[#allocation6 + $0x48] sm:$0xff]
    %v44 = vld [vmem:[#allocation6 + $0x50] sm:$0xff]
    %v45 = vld [vmem:[#allocation6 + $0x58] sm:$0xff]
    %v46 = vld [vmem:[#allocation6 + $0x60] sm:$0xff]
    %v47 = vld [vmem:[#allocation6 + $0x68] sm:$0xff]
    %v48 = vld [vmem:[#allocation6 + $0x70] sm:$0xff]
    %v49 = vld [vmem:[#allocation6 + $0x78] sm:$0xff]
    %v50 = vmul.f32 %v34, 10.0
    %v51 = vmul.f32 %v35, 10.0
    %v52 = vmul.f32 %v36, 10.0
    %v53 = vmul.f32 %v37, 10.0
    %v54 = vmul.f32 %v38, 10.0
    %v55 = vmul.f32 %v39, 10.0
    %v56 = vmul.f32 %v40, 10.0
    %v57 = vmul.f32 %v41, 10.0
    %v58 = vmul.f32 %v42, 10.0
    %v59 = vmul.f32 %v43, 10.0
    %v60 = vmul.f32 %v44, 10.0
    %v61 = vmul.f32 %v45, 10.0
    %v62 = vmul.f32 %v46, 10.0
    %v63 = vmul.f32 %v47, 10.0
    %v64 = vmul.f32 %v48, 10.0
    %v65 = vmul.f32 %v49, 10.0
    %66 = vmax.xlane.f32.xlu0 %v50
    %v67 = vpop.xlane.xlu0 %66
    %68 = vmax.xlane.f32.xlu0 %v51
    %v69 = vpop.xlane.xlu0 %68
    %70 = vmax.xlane.f32.xlu0 %v52
    %v71 = vpop.xlane.xlu0 %70
    %72 = vmax.xlane.f32.xlu0 %v53
    %v73 = vpop.xlane.xlu0 %72
    %74 = vmax.xlane.f32.xlu0 %v54
    %v75 = vpop.xlane.xlu0 %74
    %76 = vmax.xlane.f32.xlu0 %v55
    %v77 = vpop.xlane.xlu0 %76
    %78 = vmax.xlane.f32.xlu0 %v56
    %v79 = vpop.xlane.xlu0 %78
    %80 = vmax.xlane.f32.xlu0 %v57
    %v81 = vpop.xlane.xlu0 %80
    %82 = vmax.xlane.f32.xlu0 %v58
    %v83 = vpop.xlane.xlu0 %82
    %84 = vmax.xlane.f32.xlu0 %v59
    %v85 = vpop.xlane.xlu0 %84
    %86 = vmax.xlane.f32.xlu0 %v60
    %v87 = vpop.xlane.xlu0 %86
    %88 = vmax.xlane.f32.xlu0 %v61
    %v89 = vpop.xlane.xlu0 %88
    %90 = vmax.xlane.f32.xlu0 %v62
    %v91 = vpop.xlane.xlu0 %90
    %92 = vmax.xlane.f32.xlu0 %v63
    %v93 = vpop.xlane.xlu0 %92
    %94 = vmax.xlane.f32.xlu0 %v64
    %v95 = vpop.xlane.xlu0 %94
    %96 = vmax.xlane.f32.xlu0 %v65
    %v97 = vpop.xlane.xlu0 %96
    %v98 = vsub.f32 %v50, %v67
    %v99 = vsub.f32 %v51, %v69
    %v100 = vsub.f32 %v52, %v71
    %v101 = vsub.f32 %v53, %v73
    %v102 = vsub.f32 %v54, %v75
    %v103 = vsub.f32 %v55, %v77
    %v104 = vsub.f32 %v56, %v79
    %v105 = vsub.f32 %v57, %v81
    %v106 = vsub.f32 %v58, %v83
    %v107 = vsub.f32 %v59, %v85
    %v108 = vsub.f32 %v60, %v87
    %v109 = vsub.f32 %v61, %v89
    %v110 = vsub.f32 %v62, %v91
    %v111 = vsub.f32 %v63, %v93
    %v112 = vsub.f32 %v64, %v95
    %v113 = vsub.f32 %v65, %v97
    %v114 = vmul.f32 %v98, 1.442695
    %v115 = vpow.pop %v114
    %v116 = vmul.f32 %v99, 1.442695
    %v117 = vpow.pop %v116
    %v118 = vmul.f32 %v100, 1.442695
    %v119 = vpow.pop %v118
    %v120 = vmul.f32 %v101, 1.442695
    %v121 = vpow.pop %v120
    %v122 = vmul.f32 %v102, 1.442695
    %v123 = vpow.pop %v122
    %v124 = vmul.f32 %v103, 1.442695
    %v125 = vpow.pop %v124
    %v126 = vmul.f32 %v104, 1.442695
    %v127 = vpow.pop %v126
    %v128 = vmul.f32 %v105, 1.442695
    %v129 = vpow.pop %v128
    %v130 = vmul.f32 %v106, 1.442695
    %v131 = vpow.pop %v130
    %v132 = vmul.f32 %v107, 1.442695
    %v133 = vpow.pop %v132
    %v134 = vmul.f32 %v108, 1.442695
    %v135 = vpow.pop %v134
    %v136 = vmul.f32 %v109, 1.442695
    %v137 = vpow.pop %v136
    %v138 = vmul.f32 %v110, 1.442695
    %v139 = vpow.pop %v138
    %v140 = vmul.f32 %v111, 1.442695
    %v141 = vpow.pop %v140
    %v142 = vmul.f32 %v112, 1.442695
    %v143 = vpow.pop %v142
    %v144 = vmul.f32 %v113, 1.442695
    %v145 = vpow.pop %v144
    %146 = vadd.xlane.f32.xlu0 %v115
    %v147 = vpop.xlane.xlu0 %146
    %148 = vadd.xlane.f32.xlu0 %v117
    %v149 = vpop.xlane.xlu0 %148
    %150 = vadd.xlane.f32.xlu0 %v119
    %v151 = vpop.xlane.xlu0 %150
    %152 = vadd.xlane.f32.xlu0 %v121
    %v153 = vpop.xlane.xlu0 %152
    %154 = vadd.xlane.f32.xlu0 %v123
    %v155 = vpop.xlane.xlu0 %154
    %156 = vadd.xlane.f32.xlu0 %v125
    %v157 = vpop.xlane.xlu0 %156
    %158 = vadd.xlane.f32.xlu0 %v127
    %v159 = vpop.xlane.xlu0 %158
    %160 = vadd.xlane.f32.xlu0 %v129
    %v161 = vpop.xlane.xlu0 %160
    %162 = vadd.xlane.f32.xlu0 %v131
    %v163 = vpop.xlane.xlu0 %162
    %164 = vadd.xlane.f32.xlu0 %v133
    %v165 = vpop.xlane.xlu0 %164
    %166 = vadd.xlane.f32.xlu0 %v135
    %v167 = vpop.xlane.xlu0 %166
    %168 = vadd.xlane.f32.xlu0 %v137
    %v169 = vpop.xlane.xlu0 %168
    %170 = vadd.xlane.f32.xlu0 %v139
    %v171 = vpop.xlane.xlu0 %170
    %172 = vadd.xlane.f32.xlu0 %v141
    %v173 = vpop.xlane.xlu0 %172
    %174 = vadd.xlane.f32.xlu0 %v143
    %v175 = vpop.xlane.xlu0 %174
    %176 = vadd.xlane.f32.xlu0 %v145
    %v177 = vpop.xlane.xlu0 %176
    %v178 = vlog2.pop %v147
    %v179 = vmul.f32 %v178, 0.6931472
    %v180 = vlog2.pop %v149
    %v181 = vmul.f32 %v180, 0.6931472
    %v182 = vlog2.pop %v151
    %v183 = vmul.f32 %v182, 0.6931472
    %v184 = vlog2.pop %v153
    %v185 = vmul.f32 %v184, 0.6931472
    %v186 = vlog2.pop %v155
    %v187 = vmul.f32 %v186, 0.6931472
    %v188 = vlog2.pop %v157
    %v189 = vmul.f32 %v188, 0.6931472
    %v190 = vlog2.pop %v159
    %v191 = vmul.f32 %v190, 0.6931472
    %v192 = vlog2.pop %v161
    %v193 = vmul.f32 %v192, 0.6931472
    %v194 = vlog2.pop %v163
    %v195 = vmul.f32 %v194, 0.6931472
    %v196 = vlog2.pop %v165
    %v197 = vmul.f32 %v196, 0.6931472
    %v198 = vlog2.pop %v167
    %v199 = vmul.f32 %v198, 0.6931472
    %v200 = vlog2.pop %v169
    %v201 = vmul.f32 %v200, 0.6931472
    %v202 = vlog2.pop %v171
    %v203 = vmul.f32 %v202, 0.6931472
    %v204 = vlog2.pop %v173
    %v205 = vmul.f32 %v204, 0.6931472
    %v206 = vlog2.pop %v175
    %v207 = vmul.f32 %v206, 0.6931472
    %v208 = vlog2.pop %v177
    %v209 = vmul.f32 %v208, 0.6931472
    %v210 = vadd.f32 %v67, %v179
    %v211 = vadd.f32 %v69, %v181
    %v212 = vadd.f32 %v71, %v183
    %v213 = vadd.f32 %v73, %v185
    %v214 = vadd.f32 %v75, %v187
    %v215 = vadd.f32 %v77, %v189
    %v216 = vadd.f32 %v79, %v191
    %v217 = vadd.f32 %v81, %v193
    %v218 = vadd.f32 %v83, %v195
    %v219 = vadd.f32 %v85, %v197
    %v220 = vadd.f32 %v87, %v199
    %v221 = vadd.f32 %v89, %v201
    %v222 = vadd.f32 %v91, %v203
    %v223 = vadd.f32 %v93, %v205
    %v224 = vadd.f32 %v95, %v207
    %v225 = vadd.f32 %v97, %v209
    %s226 = smul.u32 0, 128
    %v227 = vlaneseq
    %v228 = vshrl.u32 %v227, 7
    %v229 = vadd.s32 %v228, 8
    %v230 = vadd.s32 %v228, 16
    %v231 = vadd.s32 %v228, 24
    %v232 = vadd.s32 %v228, 32
    %v233 = vadd.s32 %v228, 40
    %v234 = vadd.s32 %v228, 48
    %v235 = vadd.s32 %v228, 56
    %v236 = vadd.s32 %v228, 64
    %v237 = vadd.s32 %v228, 72
    %v238 = vadd.s32 %v228, 80
    %v239 = vadd.s32 %v228, 88
    %v240 = vadd.s32 %v228, 96
    %v241 = vadd.s32 %v228, 104
    %v242 = vadd.s32 %v228, 112
    %v243 = vadd.s32 %v228, 120
    %v244 = vstv %s226
    %v245 = vadd.s32 %v244, %v228
    %v246 = vadd.s32 %v244, %v229
    %v247 = vadd.s32 %v244, %v230
    %v248 = vadd.s32 %v244, %v231
    %v249 = vadd.s32 %v244, %v232
    %v250 = vadd.s32 %v244, %v233
    %v251 = vadd.s32 %v244, %v234
    %v252 = vadd.s32 %v244, %v235
    %v253 = vadd.s32 %v244, %v236
    %v254 = vadd.s32 %v244, %v237
    %v255 = vadd.s32 %v244, %v238
    %v256 = vadd.s32 %v244, %v239
    %v257 = vadd.s32 %v244, %v240
    %v258 = vadd.s32 %v244, %v241
    %v259 = vadd.s32 %v244, %v242
    %v260 = vadd.s32 %v244, %v243
    %v261 = vld [vmem:[#allocation4] sm:$0x1]
    %vm262 = vcmp.lt.s32.totalorder %v245, 8
    %vm263 = vcmp.lt.s32.totalorder %v246, 8
    %vm264 = vcmp.lt.s32.totalorder %v247, 8
    %vm265 = vcmp.lt.s32.totalorder %v248, 8
    %vm266 = vcmp.lt.s32.totalorder %v249, 8
    %vm267 = vcmp.lt.s32.totalorder %v250, 8
    %vm268 = vcmp.lt.s32.totalorder %v251, 8
    %vm269 = vcmp.lt.s32.totalorder %v252, 8
    %vm270 = vcmp.lt.s32.totalorder %v253, 8
    %vm271 = vcmp.lt.s32.totalorder %v254, 8
    %vm272 = vcmp.lt.s32.totalorder %v255, 8
    %vm273 = vcmp.lt.s32.totalorder %v256, 8
    %vm274 = vcmp.lt.s32.totalorder %v257, 8
    %vm275 = vcmp.lt.s32.totalorder %v258, 8
    %vm276 = vcmp.lt.s32.totalorder %v259, 8
    %vm277 = vcmp.lt.s32.totalorder %v260, 8
    %v278 = vsel %vm262, %v210, 0.0
    %v279 = vsel %vm263, %v211, 0.0
    %v280 = vsel %vm264, %v212, 0.0
    %v281 = vsel %vm265, %v213, 0.0
    %v282 = vsel %vm266, %v214, 0.0
    %v283 = vsel %vm267, %v215, 0.0
    %v284 = vsel %vm268, %v216, 0.0
    %v285 = vsel %vm269, %v217, 0.0
    %v286 = vsel %vm270, %v218, 0.0
    %v287 = vsel %vm271, %v219, 0.0
    %v288 = vsel %vm272, %v220, 0.0
    %v289 = vsel %vm273, %v221, 0.0
    %v290 = vsel %vm274, %v222, 0.0
    %v291 = vsel %vm275, %v223, 0.0
    %v292 = vsel %vm276, %v224, 0.0
    %v293 = vsel %vm277, %v225, 0.0
    %vm294 = vcmask 7168
    %v295 = vsel %vm294, %v278, 0.0
    %v296 = vsel %vm294, %v279, 0.0
    %v297 = vadd.f32 %v295, %v296
    %v298 = vsel %vm294, %v280, 0.0
    %v299 = vadd.f32 %v297, %v298
    %v300 = vsel %vm294, %v281, 0.0
    %v301 = vadd.f32 %v299, %v300
    %v302 = vsel %vm294, %v282, 0.0
    %v303 = vadd.f32 %v301, %v302
    %v304 = vsel %vm294, %v283, 0.0
    %v305 = vadd.f32 %v303, %v304
    %v306 = vsel %vm294, %v284, 0.0
    %v307 = vadd.f32 %v305, %v306
    %v308 = vsel %vm294, %v285, 0.0
    %v309 = vadd.f32 %v307, %v308
    %v310 = vsel %vm294, %v286, 0.0
    %v311 = vadd.f32 %v309, %v310
    %v312 = vsel %vm294, %v287, 0.0
    %v313 = vadd.f32 %v311, %v312
    %v314 = vsel %vm294, %v288, 0.0
    %v315 = vadd.f32 %v313, %v314
    %v316 = vsel %vm294, %v289, 0.0
    %v317 = vadd.f32 %v315, %v316
    %v318 = vsel %vm294, %v290, 0.0
    %v319 = vadd.f32 %v317, %v318
    %v320 = vsel %vm294, %v291, 0.0
    %v321 = vadd.f32 %v319, %v320
    %v322 = vsel %vm294, %v292, 0.0
    %v323 = vadd.f32 %v321, %v322
    %v324 = vsel %vm294, %v293, 0.0
    %v325 = vadd.f32 %v323, %v324
    %326 = vadd.xlane.f32.xlu0 %v325
    %v327 = vpop.xlane.xlu0 %326
    %v328 = vrot.slane %v327, 4
    %v329 = vadd.f32 %v327, %v328
    %v330 = vrot.slane %v329, 2
    %v331 = vadd.f32 %v329, %v330
    %v332 = vrot.slane %v331, 1
    %v333 = vadd.f32 %v331, %v332
    %s334 = vtos %v333
    %v335 = vstv %s334
    %v336 = vadd.f32 %v261, %v335
    %vm337 = vcmask 0
    %338 = vst.msk [vmem:[#allocation4] sm:$0x1] %vm337, %v336
    %v339 = vld [vmem:[#allocation2] sm:$0xff]
    %v340 = vmax.f32 %v50, %v54
    %v341 = vmax.f32 %v51, %v55
    %v342 = vmax.f32 %v52, %v56
    %v343 = vmax.f32 %v53, %v57
    %v344 = vmax.f32 %v340, %v58
    %v345 = vmax.f32 %v341, %v59
    %v346 = vmax.f32 %v342, %v60
    %v347 = vmax.f32 %v343, %v61
    %v348 = vmax.f32 %v344, %v62
    %v349 = vmax.f32 %v345, %v63
    %v350 = vmax.f32 %v346, %v64
    %v351 = vmax.f32 %v347, %v65
    %v352 = vmax.f32 %v348, %v349
    %v353 = vmax.f32 %v350, %v351
    %v354 = vmax.f32 %v352, %v353
    %v355 = vmax.f32 %v339, %v354
    %v356 = vsub.f32 %v339, %v355
    %v357 = vmul.f32 %v356, 1.442695
    %v358 = vpow.pop %v357
    %359 = vst [vmem:[#allocation2] sm:$0xff] %v355
    %v360 = vmax.f32 %v67, %v75
    %v361 = vmax.f32 %v69, %v77
    %v362 = vmax.f32 %v71, %v79
    %v363 = vmax.f32 %v73, %v81
    %v364 = vmax.f32 %v360, %v83
    %v365 = vmax.f32 %v361, %v85
    %v366 = vmax.f32 %v362, %v87
    %v367 = vmax.f32 %v363, %v89
    %v368 = vmax.f32 %v364, %v91
    %v369 = vmax.f32 %v365, %v93
    %v370 = vmax.f32 %v366, %v95
    %v371 = vmax.f32 %v367, %v97
    %v372 = vmax.f32 %v368, %v369
    %v373 = vmax.f32 %v370, %v371
    %v374 = vmax.f32 %v372, %v373
    %v375 = vrot.slane %v374, 4
    %v376 = vmax.f32 %v374, %v375
    %v377 = vrot.slane %v376, 2
    %v378 = vmax.f32 %v376, %v377
    %v379 = vrot.slane %v378, 1
    %v380 = vmax.f32 %v378, %v379
    %s381 = vtos %v380
    %v382 = vlaneseq
    %v383 = vand.u32 %v382, 127
    %vm384 = vcmp.lt.s32.totalorder %v383, 8
    %v385 = vstv %s381
    %v386 = vsub.f32 %v385, %v355
    %v387 = vsel %vm384, %v386, -inf
    %388 = vmax.xlane.f32.xlu0 %v387
    %v389 = vpop.xlane.xlu0 %388
    %v390 = vrot.slane %v389, 4
    %v391 = vmax.f32 %v389, %v390
    %v392 = vrot.slane %v391, 2
    %v393 = vmax.f32 %v391, %v392
    %v394 = vrot.slane %v393, 1
    %v395 = vmax.f32 %v393, %v394
    %s396 = vtos %v395
    %p397 = scmp.le.f32.partialorder %s396, 60.0
    // Predicated region
    $region14: #{tpu_custom_call.1} parent=1 // pred_check
      %p398 = pneg %p397
    $region15: #{tpu_custom_call.1} parent=1 // pred_check_branch
      %400 = sbr.rel (%p398) target = $region17
    $region16: #{tpu_custom_call.1} parent=1 // pred_region
      %v401 = vmin.f32 %v386, 80.0
      %v402 = vmul.f32 %v401, 1.442695
      %v403 = vpow.pop %v402
      %v404 = vsub.f32 %v67, %v385
      %v405 = vsub.f32 %v69, %v385
      %v406 = vsub.f32 %v71, %v385
      %v407 = vsub.f32 %v73, %v385
      %v408 = vsub.f32 %v75, %v385
      %v409 = vsub.f32 %v77, %v385
      %v410 = vsub.f32 %v79, %v385
      %v411 = vsub.f32 %v81, %v385
      %v412 = vsub.f32 %v83, %v385
      %v413 = vsub.f32 %v85, %v385
      %v414 = vsub.f32 %v87, %v385
      %v415 = vsub.f32 %v89, %v385
      %v416 = vsub.f32 %v91, %v385
      %v417 = vsub.f32 %v93, %v385
      %v418 = vsub.f32 %v95, %v385
      %v419 = vsub.f32 %v97, %v385
      %v420 = vmul.f32 %v404, 1.442695
      %v421 = vpow.pop %v420
      %v422 = vmul.f32 %v405, 1.442695
      %v423 = vpow.pop %v422
      %v424 = vmul.f32 %v406, 1.442695
      %v425 = vpow.pop %v424
      %v426 = vmul.f32 %v407, 1.442695
      %v427 = vpow.pop %v426
      %v428 = vmul.f32 %v408, 1.442695
      %v429 = vpow.pop %v428
      %v430 = vmul.f32 %v409, 1.442695
      %v431 = vpow.pop %v430
      %v432 = vmul.f32 %v410, 1.442695
      %v433 = vpow.pop %v432
      %v434 = vmul.f32 %v411, 1.442695
      %v435 = vpow.pop %v434
      %v436 = vmul.f32 %v412, 1.442695
      %v437 = vpow.pop %v436
      %v438 = vmul.f32 %v413, 1.442695
      %v439 = vpow.pop %v438
      %v440 = vmul.f32 %v414, 1.442695
      %v441 = vpow.pop %v440
      %v442 = vmul.f32 %v415, 1.442695
      %v443 = vpow.pop %v442
      %v444 = vmul.f32 %v416, 1.442695
      %v445 = vpow.pop %v444
      %v446 = vmul.f32 %v417, 1.442695
      %v447 = vpow.pop %v446
      %v448 = vmul.f32 %v418, 1.442695
      %v449 = vpow.pop %v448
      %v450 = vmul.f32 %v419, 1.442695
      %v451 = vpow.pop %v450
      %v452 = vmul.f32 %v115, %v421
      %v453 = vmul.f32 %v117, %v423
      %v454 = vmul.f32 %v119, %v425
      %v455 = vmul.f32 %v121, %v427
      %v456 = vmul.f32 %v123, %v429
      %v457 = vmul.f32 %v125, %v431
      %v458 = vmul.f32 %v127, %v433
      %v459 = vmul.f32 %v129, %v435
      %v460 = vmul.f32 %v131, %v437
      %v461 = vmul.f32 %v133, %v439
      %v462 = vmul.f32 %v135, %v441
      %v463 = vmul.f32 %v137, %v443
      %v464 = vmul.f32 %v139, %v445
      %v465 = vmul.f32 %v141, %v447
      %v466 = vmul.f32 %v143, %v449
      %v467 = vmul.f32 %v145, %v451
      %v468 = vld [vmem:[#allocation3] sm:$0xff]
      %v469 = vmul.f32 %v468, %v358
      %v470 = vadd.f32 %v452, %v453
      %v471 = vadd.f32 %v470, %v454
      %v472 = vadd.f32 %v471, %v455
      %v473 = vadd.f32 %v472, %v456
      %v474 = vadd.f32 %v473, %v457
      %v475 = vadd.f32 %v474, %v458
      %v476 = vadd.f32 %v475, %v459
      %v477 = vadd.f32 %v476, %v460
      %v478 = vadd.f32 %v477, %v461
      %v479 = vadd.f32 %v478, %v462
      %v480 = vadd.f32 %v479, %v463
      %v481 = vadd.f32 %v480, %v464
      %v482 = vadd.f32 %v481, %v465
      %v483 = vadd.f32 %v482, %v466
      %v484 = vadd.f32 %v483, %v467
      %v485 = vmul.f32 %v484, %v403
      %v486 = vadd.f32 %v469, %v485
      %487 = vst [vmem:[#allocation3] sm:$0xff] %v486
    $region17: #{tpu_custom_call.1} parent=1 // pred_fallthru
      _
    %p488 = pneg %p397
    // Predicated region
    $region18: #{tpu_custom_call.1} parent=1 // pred_check
      _
    $region19: #{tpu_custom_call.1} parent=1 // pred_check_branch
      %490 = sbr.rel (%p397) target = $region21
    $region20: #{tpu_custom_call.1} parent=1 // pred_region
      %v491 = vsub.f32 %v50, %v355
      %v492 = vsub.f32 %v51, %v355
      %v493 = vsub.f32 %v52, %v355
      %v494 = vsub.f32 %v53, %v355
      %v495 = vsub.f32 %v54, %v355
      %v496 = vsub.f32 %v55, %v355
      %v497 = vsub.f32 %v56, %v355
      %v498 = vsub.f32 %v57, %v355
      %v499 = vsub.f32 %v58, %v355
      %v500 = vsub.f32 %v59, %v355
      %v501 = vsub.f32 %v60, %v355
      %v502 = vsub.f32 %v61, %v355
      %v503 = vsub.f32 %v62, %v355
      %v504 = vsub.f32 %v63, %v355
      %v505 = vsub.f32 %v64, %v355
      %v506 = vsub.f32 %v65, %v355
      %v507 = vmul.f32 %v491, 1.442695
      %v508 = vpow.pop %v507
      %v509 = vmul.f32 %v492, 1.442695
      %v510 = vpow.pop %v509
      %v511 = vmul.f32 %v493, 1.442695
      %v512 = vpow.pop %v511
      %v513 = vmul.f32 %v494, 1.442695
      %v514 = vpow.pop %v513
      %v515 = vmul.f32 %v495, 1.442695
      %v516 = vpow.pop %v515
      %v517 = vmul.f32 %v496, 1.442695
      %v518 = vpow.pop %v517
      %v519 = vmul.f32 %v497, 1.442695
      %v520 = vpow.pop %v519
      %v521 = vmul.f32 %v498, 1.442695
      %v522 = vpow.pop %v521
      %v523 = vmul.f32 %v499, 1.442695
      %v524 = vpow.pop %v523
      %v525 = vmul.f32 %v500, 1.442695
      %v526 = vpow.pop %v525
      %v527 = vmul.f32 %v501, 1.442695
      %v528 = vpow.pop %v527
      %v529 = vmul.f32 %v502, 1.442695
      %v530 = vpow.pop %v529
      %v531 = vmul.f32 %v503, 1.442695
      %v532 = vpow.pop %v531
      %v533 = vmul.f32 %v504, 1.442695
      %v534 = vpow.pop %v533
      %v535 = vmul.f32 %v505, 1.442695
      %v536 = vpow.pop %v535
      %v537 = vmul.f32 %v506, 1.442695
      %v538 = vpow.pop %v537
      %v539 = vadd.f32 %v508, %v510
      %v540 = vadd.f32 %v539, %v512
      %v541 = vadd.f32 %v540, %v514
      %v542 = vadd.f32 %v541, %v516
      %v543 = vadd.f32 %v542, %v518
      %v544 = vadd.f32 %v543, %v520
      %v545 = vadd.f32 %v544, %v522
      %v546 = vadd.f32 %v545, %v524
      %v547 = vadd.f32 %v546, %v526
      %v548 = vadd.f32 %v547, %v528
      %v549 = vadd.f32 %v548, %v530
      %v550 = vadd.f32 %v549, %v532
      %v551 = vadd.f32 %v550, %v534
      %v552 = vadd.f32 %v551, %v536
      %v553 = vadd.f32 %v552, %v538
      %v554 = vld [vmem:[#allocation3] sm:$0xff]
      %v555 = vmul.f32 %v554, %v358
      %v556 = vadd.f32 %v555, %v553
      %557 = vst [vmem:[#allocation3] sm:$0xff] %v556
    $region21: #{tpu_custom_call.1} parent=1 // pred_fallthru
      _
    %vm558 = vcmp.eq.s32.totalorder %v228, %v383
    %vm559 = vcmp.eq.s32.totalorder %v229, %v383
    %vm560 = vcmp.eq.s32.totalorder %v230, %v383
    %vm561 = vcmp.eq.s32.totalorder %v231, %v383
    %vm562 = vcmp.eq.s32.totalorder %v232, %v383
    %vm563 = vcmp.eq.s32.totalorder %v233, %v383
    %vm564 = vcmp.eq.s32.totalorder %v234, %v383
    %vm565 = vcmp.eq.s32.totalorder %v235, %v383
    %vm566 = vcmp.eq.s32.totalorder %v236, %v383
    %vm567 = vcmp.eq.s32.totalorder %v237, %v383
    %vm568 = vcmp.eq.s32.totalorder %v238, %v383
    %vm569 = vcmp.eq.s32.totalorder %v239, %v383
    %vm570 = vcmp.eq.s32.totalorder %v240, %v383
    %vm571 = vcmp.eq.s32.totalorder %v241, %v383
    %vm572 = vcmp.eq.s32.totalorder %v242, %v383
    %vm573 = vcmp.eq.s32.totalorder %v243, %v383
    %vm574 = vmand %vm558, %vm262
    %vm575 = vmand %vm559, %vm263
    %vm576 = vmand %vm560, %vm264
    %vm577 = vmand %vm561, %vm265
    %vm578 = vmand %vm562, %vm266
    %vm579 = vmand %vm563, %vm267
    %vm580 = vmand %vm564, %vm268
    %vm581 = vmand %vm565, %vm269
    %vm582 = vmand %vm566, %vm270
    %vm583 = vmand %vm567, %vm271
    %vm584 = vmand %vm568, %vm272
    %vm585 = vmand %vm569, %vm273
    %vm586 = vmand %vm570, %vm274
    %vm587 = vmand %vm571, %vm275
    %vm588 = vmand %vm572, %vm276
    %vm589 = vmand %vm573, %vm277
    %v590 = vld [vmem:[#allocation5] sm:$0x1]
    %v591 = vsel %vm574, %v50, 0.0
    %v592 = vsel %vm575, %v51, 0.0
    %v593 = vsel %vm576, %v52, 0.0
    %v594 = vsel %vm577, %v53, 0.0
    %v595 = vsel %vm578, %v54, 0.0
    %v596 = vsel %vm579, %v55, 0.0
    %v597 = vsel %vm580, %v56, 0.0
    %v598 = vsel %vm581, %v57, 0.0
    %v599 = vsel %vm582, %v58, 0.0
    %v600 = vsel %vm583, %v59, 0.0
    %v601 = vsel %vm584, %v60, 0.0
    %v602 = vsel %vm585, %v61, 0.0
    %v603 = vsel %vm586, %v62, 0.0
    %v604 = vsel %vm587, %v63, 0.0
    %v605 = vsel %vm588, %v64, 0.0
    %v606 = vsel %vm589, %v65, 0.0
    %v607 = vadd.f32 %v591, %v592
    %v608 = vadd.f32 %v607, %v593
    %v609 = vadd.f32 %v608, %v594
    %v610 = vadd.f32 %v609, %v595
    %v611 = vadd.f32 %v610, %v596
    %v612 = vadd.f32 %v611, %v597
    %v613 = vadd.f32 %v612, %v598
    %v614 = vadd.f32 %v613, %v599
    %v615 = vadd.f32 %v614, %v600
    %v616 = vadd.f32 %v615, %v601
    %v617 = vadd.f32 %v616, %v602
    %v618 = vadd.f32 %v617, %v603
    %v619 = vadd.f32 %v618, %v604
    %v620 = vadd.f32 %v619, %v605
    %v621 = vadd.f32 %v620, %v606
    %622 = vadd.xlane.f32.xlu0 %v621
    %v623 = vpop.xlane.xlu0 %622
    %v624 = vrot.slane %v623, 4
    %v625 = vadd.f32 %v623, %v624
    %v626 = vrot.slane %v625, 2
    %v627 = vadd.f32 %v625, %v626
    %v628 = vrot.slane %v627, 1
    %v629 = vadd.f32 %v627, %v628
    %s630 = vtos %v629
    %v631 = vstv %s630
    %v632 = vadd.f32 %v590, %v631
    %633 = vst.msk [vmem:[#allocation5] sm:$0x1] %vm337, %v632
    // Predicated region
    $region22: #{tpu_custom_call.1} parent=1 // pred_check
      %p634 = pneg %p25
    $region23: #{tpu_custom_call.1} parent=1 // pred_check_branch
      %636 = sbr.rel (%p634) target = $region25
    $region24: #{tpu_custom_call.1} parent=1 // pred_region
      %v637 = vld [vmem:[#allocation2] sm:$0xff]
      %v638 = vld [vmem:[#allocation3] sm:$0xff]
      %v639 = vrot.slane %v637, 4
      %v640 = vmax.f32 %v637, %v639
      %v641 = vrot.slane %v640, 2
      %v642 = vmax.f32 %v640, %v641
      %v643 = vrot.slane %v642, 1
      %v644 = vmax.f32 %v642, %v643
      %v645 = vsub.f32 %v637, %v644
      %v646 = vmul.f32 %v645, 1.442695
      %v647 = vpow.pop %v646
      %v648 = vmul.f32 %v638, %v647
      %v649 = vrot.slane %v648, 4
      %v650 = vadd.f32 %v648, %v649
      %v651 = vrot.slane %v650, 2
      %v652 = vadd.f32 %v650, %v651
      %v653 = vrot.slane %v652, 1
      %v654 = vadd.f32 %v652, %v653
      %v655 = vlog2.pop %v654
      %v656 = vmul.f32 %v655, 0.6931472
      %v657 = vadd.f32 %v644, %v656
      %v658 = vsel %vm384, %v657, 0.0
      %vm659 = vcmask 1040384
      %v660 = vsel %vm659, %v658, 0.0
      %661 = vadd.xlane.f32.xlu0 %v660
      %v662 = vpop.xlane.xlu0 %661
      %v663 = vrot.slane %v662, 4
      %v664 = vadd.f32 %v662, %v663
      %v665 = vrot.slane %v664, 2
      %v666 = vadd.f32 %v664, %v665
      %v667 = vrot.slane %v666, 1
      %v668 = vadd.f32 %v666, %v667
      %s669 = vtos %v668
      %v670 = vstv %s669
      %v671 = vld [vmem:[#allocation4] sm:$0x1]
      %v672 = vld [vmem:[#allocation5] sm:$0x1]
      %v673 = vsub.f32 %v671, %v672
      %v674 = vmul.f32 %v673, 0.125
      %v675 = vsub.f32 %v670, %v672
      %v676 = vmul.f32 %v675, 0.125
      %vm677 = vcmp.eq.s32.totalorder %v383, 0
      %679 = vset.pattern.permute.xlu0 0
      %680 = vperm.xlu0 %679, %v674
      %v681 = vpop.permute.xlu0 %680
      %v683 = vperm.slane %v681, 0
      %685 = vset.pattern.permute.xlu0 0
      %686 = vperm.xlu0 %685, %v676
      %v687 = vpop.permute.xlu0 %686
      %v689 = vperm.slane %v687, 0
      %v690 = vsel %vm677, %v683, %v689
      %vm691 = vcmask 8192
      %692 = vst.msk [vmem:[#allocation9] sm:$0x1] %vm691, %v690
    $region25: #{tpu_custom_call.1} parent=1 // pred_fallthru
      _
    // Predicated region
    $region26: #{tpu_custom_call.1} parent=1 // pred_check
      _
    $region27: #{tpu_custom_call.1} parent=1 // pred_check_branch
      %694 = sbr.rel (0) target = $region29
    $region28: #{tpu_custom_call.1} parent=1 // pred_region
      %696 = vsyncadd [#allocation8], 0
      %s698 = sshll.u32 [#allocation9], 4
      %s699 = int_to_ptr.vmem [resolvable:$true] %s698
      %s700 = sshll.u32 %s1, 4
      %s701 = int_to_ptr.hbm [resolvable:$true] %s700
      %703 = dma.vmem_to_hbm [thread:$0]  %s699, 16, %s701, [#allocation8]
    $region29: #{tpu_custom_call.1} parent=1 // pred_fallthru
      _
    // Predicated region
    $region30: #{tpu_custom_call.1} parent=1 // pred_check
      _
    $region31: #{tpu_custom_call.1} parent=1 // pred_check_branch
      %705 = sbr.rel (0) target = $region33
    $region32: #{tpu_custom_call.1} parent=1 // pred_region
      %707 = dma.done [#allocation8], 16
    $region33: #{tpu_custom_call.1} parent=1 // pred_fallthru
      _
    %708 = vsyncpa [#allocation7], 1
    %709 = vsyncpa [#allocation8], 1

</llo_original>
